<compile_context>
chip_gen: v5e
topology: v5e:2x2
jax: 0.10.0
libtpu: 0.0.40
codegen_flags: <defaults>
</compile_context>

<pallas_src>
import math
from functools import partial

import jax
import jax.numpy as jnp
import numpy as np
from jax.experimental import pallas as pl
from jax.experimental.pallas import tpu as pltpu


# ----------------------------------------------------------------------------
# Kernels
# ----------------------------------------------------------------------------
def _onehot_kernel(z_ref, wT_ref, beta_ref, p_ref, lane_ref, o_ref):
    """One row-tile of the folded one-hot forward pass.

    Shapes (TNf = folded rows per tile, r = lane-fold factor):
      z_ref    : (TNf, r*inp)   bf16   streamed
      wT_ref   : (r*inp, r*of)  bf16   kron(I_r, W.T)              (resident)
      beta_ref : (1,     r*of)  f32    beta row tiled r times      (resident)
      p_ref    : (r*of,  r*oc)  bf16   block-diag bit packing      (resident)
      lane_ref : (1,     r*oc)  f32    cell index per lane         (resident)
      o_ref    : (TNf,   r*oc)  out dtype, lane-dense (multiple of 128)
    """
    # bf16 x bf16 -> f32 accumulate: single-pass MXU path on all generations.
    y = jnp.dot(z_ref[...], wT_ref[...], preferred_element_type=jnp.float32)
    # Strict threshold; emit 0/1 bits directly in bf16 (single exact cast).
    bits = (y > beta_ref[...]).astype(jnp.bfloat16)
    # Pack bits into per-output cell codes (powers of two -> exact in f32).
    code = jnp.dot(bits, p_ref[...], preferred_element_type=jnp.float32)
    # One-hot against the precomputed per-lane cell index.
    o_ref[...] = (code == lane_ref[...]).astype(o_ref.dtype)


def _code_kernel(z_ref, wT_ref, beta_ref, pc_ref, o_ref):
    """Integer cell-code variant: o_ref is (tile_rows, outp_dim) int32."""
    y = jnp.dot(z_ref[...], wT_ref[...], preferred_element_type=jnp.float32)
    bits = (y > beta_ref[...]).astype(jnp.bfloat16)
    code = jnp.dot(bits, pc_ref[...], preferred_element_type=jnp.float32)
    o_ref[...] = code.astype(jnp.int32)


# ----------------------------------------------------------------------------
# Wrapper helpers
# ----------------------------------------------------------------------------
def _round_up(a, b):
    return ((a + b - 1) // b) * b


def _vmem_capacity_bytes():
    try:
        return int(pltpu.get_tpu_info().vmem_capacity_bytes)
    except Exception:
        return 64 << 20  # conservative (v7x-sized) if the query is unavailable


def _choose_tile_rows(n, row_quant, cap_rows):
    """Pick the row tile: prefer >=2 grid steps when N allows (so v7x can shard
    the 'parallel' axis across both TensorCores), then minimal padding, then
    the largest tile (<= cap) to amortize the ~0.35us/step overhead."""
    hi = min(max(cap_rows, row_quant), _round_up(n, row_quant))
    hi -= hi % row_quant
    cands = list(range(row_quant, hi + 1, row_quant))
    multi = [t for t in cands if pl.cdiv(n, t) >= 2]
    pool = multi if multi else cands
    return min(pool, key=lambda t: (_round_up(n, t), -t))


# ----------------------------------------------------------------------------
# Public entry point
# ----------------------------------------------------------------------------
@partial(jax.jit,
         static_argnames=("fun_dim", "tile_n", "max_fold", "out_dtype",
                          "return_code"))
def hyperplane_context(z, weight, beta, fun_dim, *, tile_n=None, max_fold=4,
                       out_dtype=jnp.bfloat16, return_code=False):
    """Forward pass of HyperplaneContext.

    z      : (N, inp_dim) float
    weight : (outp_dim*fun_dim, inp_dim) float   (nn.Linear weight, no bias)
    beta   : (outp_dim, fun_dim) float
    returns: (N, outp_dim, 2**fun_dim) one-hot in `out_dtype` (values 0/1), or
             (N, outp_dim) int32 cell codes when return_code=True.
    """
    z = jnp.asarray(z)
    weight = jnp.asarray(weight, jnp.float32)
    beta = jnp.asarray(beta, jnp.float32)

    N, inp_dim = z.shape
    of = weight.shape[0]                       # outp_dim * fun_dim
    outp_dim = of // fun_dim
    assert outp_dim * fun_dim == of
    n_codes = 2 ** fun_dim
    oc = outp_dim * n_codes                    # output lanes per (unfolded) row

    # bf16 operands for the single-pass MXU path (cast once in the wrapper,
    # which also halves the z HBM stream feeding the kernel).
    zb = z.astype(jnp.bfloat16)
    wT = weight.T.astype(jnp.bfloat16)         # (inp, of)

    # Hardware-derived budgets: ~75% of physical VMEM as the scoped limit,
    # bigger row tiles on 128 MiB chips (v5e/v6e) than on 64 MiB v7x.
    vmem_cap = _vmem_capacity_bytes()
    big_vmem = vmem_cap >= (100 << 20)
    vmem_limit = max(32 << 20, min(int(0.75 * vmem_cap), 100 << 20))
    osz = jnp.dtype(out_dtype).itemsize

    # ------------------------------------------------------------------ codes
    if return_code:
        # Small-output variant: 2**F x fewer bytes written than the one-hot.
        # Output last dim is outp_dim (< 128 -> masked stores), acceptable
        # because the whole output is tiny.
        row_quant = 8
        cap = tile_n if tile_n is not None else (1024 if big_vmem else 512)
        per_row = 2 * (inp_dim * 2 + outp_dim * 4) + of * 6 + outp_dim * 4
        fit = (vmem_limit - (4 << 20)) // max(per_row, 1)
        cap = max(row_quant, min(cap, fit // row_quant * row_quant))
        tile_rows = _choose_tile_rows(N, row_quant, cap)
        n_pad = _round_up(N, tile_rows)
        if n_pad != N:
            zb_c = jnp.pad(zb, ((0, n_pad - N), (0, 0)))
        else:
            zb_c = zb

        pc_np = np.zeros((of, outp_dim), dtype=np.float32)
        for o in range(outp_dim):
            for k in range(fun_dim):
                pc_np[o * fun_dim + k, o] = 2.0 ** (fun_dim - 1 - k)

        code = pl.pallas_call(
            _code_kernel,
            out_shape=jax.ShapeDtypeStruct((n_pad, outp_dim), jnp.int32),
            grid=(n_pad // tile_rows,),
            in_specs=[
                pl.BlockSpec((tile_rows, inp_dim), lambda i: (i, 0)),   # z
                pl.BlockSpec((inp_dim, of), lambda i: (0, 0)),          # W.T
                pl.BlockSpec((1, of), lambda i: (0, 0)),                # beta
                pl.BlockSpec((of, outp_dim), lambda i: (0, 0)),         # packing
            ],
            out_specs=pl.BlockSpec((tile_rows, outp_dim), lambda i: (i, 0)),
            compiler_params=pltpu.CompilerParams(
                dimension_semantics=("parallel",),
                vmem_limit_bytes=vmem_limit),
        )(zb_c, wT, beta.reshape(1, of), jnp.asarray(pc_np, jnp.bfloat16))
        return code[:N] if n_pad != N else code

    # ---------------------------------------------------------------- one-hot
    # Lane-dense fold: store r adjacent rows per physical row so the stored
    # last dim (r*oc) is a multiple of 128 lanes (no masked vst partial stores).
    r = 128 // math.gcd(oc, 128)
    # Bound the kron(I_r, .) blow-up: it wastes (r-1)/r of the first matmul's
    # MXU work and its resident is ~r^2*inp*of*2 bytes (pipeline-buffered).
    kron_bytes = (r * inp_dim) * (r * of) * 2 + (r * of) * (r * oc) * 2
    if r > max_fold or (r > 1 and 2 * kron_bytes > (8 << 20)):
        # TODO(synk): very small / odd oc falls back to masked partial stores;
        # the r^2-free alternative is an in-kernel (tile, of)->(tile/r, r*of)
        # relayout of the bf16 bits before the packing matmul.
        r = 1

    row_quant = 8 * r                                  # sublane x fold granularity
    cap = tile_n if tile_n is not None else (512 if big_vmem else 256)
    resident = 2 * ((r * inp_dim) * (r * of) * 2 + (r * of) * 4
                    + (r * of) * (r * oc) * 2 + (r * oc) * 4)
    per_row = 2 * (inp_dim * 2 + oc * osz) + of * 6 + oc * (5 + osz)
    fit = (vmem_limit - resident - (4 << 20)) // max(per_row, 1)
    cap = max(row_quant, min(cap, fit // row_quant * row_quant))
    tile_rows = _choose_tile_rows(N, row_quant, cap)
    n_pad = _round_up(N, tile_rows)
    tnf = tile_rows // r                               # folded rows per tile
    grid = (n_pad // tile_rows,)

    if n_pad != N:
        zb = jnp.pad(zb, ((0, n_pad - N), (0, 0)))
    # (n_pad, inp) -> (n_pad/r, r*inp): contiguous row-major reshape (free).
    z_fold = zb.reshape(n_pad // r, r * inp_dim)

    # Folded constants (built once per shape at trace time under jit).
    if r > 1:
        wT_fold = jnp.kron(jnp.eye(r, dtype=jnp.bfloat16), wT)   # (r*inp, r*of)
    else:
        wT_fold = wT
    beta_fold = jnp.tile(beta.reshape(1, of), (1, r))             # (1, r*of) f32

    # Bit-packing matrix (plays the role of `caster`):
    #   P[o*F + k, o*C + c] = 2**(F-1-k) for all c   (0 elsewhere)
    p_np = np.zeros((of, oc), dtype=np.float32)
    for o in range(outp_dim):
        for k in range(fun_dim):
            p_np[o * fun_dim + k, o * n_codes:(o + 1) * n_codes] = \
                2.0 ** (fun_dim - 1 - k)
    p_fold = jnp.asarray(np.kron(np.eye(r, dtype=np.float32), p_np), jnp.bfloat16)

    # Per-lane cell index 0..2**F-1, repeated for every output and fold slot.
    lane_fold = jnp.asarray(
        np.tile(np.arange(n_codes, dtype=np.float32), outp_dim * r)[None, :])

    # NOTE: a 3-deep pipeline (pipeline_mode=pl.Buffered(3)) on the z/out specs
    # is a possible further tweak on 128 MiB chips; default double-buffering is
    # kept here for portability across generations.
    out2d = pl.pallas_call(
        _onehot_kernel,
        out_shape=jax.ShapeDtypeStruct((n_pad // r, r * oc), out_dtype),
        grid=grid,
        in_specs=[
            pl.BlockSpec((tnf, r * inp_dim), lambda i: (i, 0)),     # z (streamed)
            pl.BlockSpec((r * inp_dim, r * of), lambda i: (0, 0)),  # kron(I_r, W.T)
            pl.BlockSpec((1, r * of), lambda i: (0, 0)),            # beta row
            pl.BlockSpec((r * of, r * oc), lambda i: (0, 0)),       # packing matrix
            pl.BlockSpec((1, r * oc), lambda i: (0, 0)),            # lane cell ids
        ],
        out_specs=pl.BlockSpec((tnf, r * oc), lambda i: (i, 0)),
        compiler_params=pltpu.CompilerParams(
            dimension_semantics=("parallel",),
            vmem_limit_bytes=vmem_limit),
    )(z_fold, wT_fold, beta_fold, p_fold, lane_fold)

    # (n_pad/r, r*oc) is row-major identical to (n_pad, outp_dim, 2**F).
    out = out2d.reshape(n_pad, outp_dim, n_codes)
    return out[:N] if n_pad != N else out


# ----------------------------------------------------------------------------
# Reference + self-check
# ----------------------------------------------------------------------------
def _reference_code(z, weight, beta, fun_dim):
    """Pure-JAX f32 reference mirroring the PyTorch forward -> cell indices."""
    N = z.shape[0]
    of = weight.shape[0]
    outp_dim = of // fun_dim
    y = jnp.dot(z, weight.T, precision=jax.lax.Precision.HIGHEST)
    bits = (y.reshape(N, outp_dim, fun_dim) > beta[None]).astype(jnp.float32)
    w2 = (2.0 ** jnp.arange(fun_dim - 1, -1, -1)).astype(jnp.float32)
    return jnp.einsum("nof,f->no", bits, w2).astype(jnp.int32)


def _run_and_check(key, N, inp_dim, outp_dim, fun_dim, check_code=False):
    n_codes = 2 ** fun_dim
    k_w, k_b, k_z = jax.random.split(key, 3)
    # Deterministic "init_weights": normal(std=36) for fun.weight, std=9 for beta.
    weight = 36.0 * jax.random.normal(k_w, (outp_dim * fun_dim, inp_dim), jnp.float32)
    beta = 9.0 * jax.random.normal(k_b, (outp_dim, fun_dim), jnp.float32)
    z = jax.random.normal(k_z, (N, inp_dim), jnp.float32)

    out = jax.block_until_ready(hyperplane_context(z, weight, beta, fun_dim))

    # Structural checks: shape, binary, exactly one-hot over the 2**F cells.
    assert out.shape == (N, outp_dim, n_codes), out.shape
    out_f = out.astype(jnp.float32)
    assert bool(jnp.all(jnp.sum(out_f, axis=-1) == 1.0))
    assert bool(jnp.all((out_f == 0.0) | (out_f == 1.0)))

    # Agreement with the f32 reference (bf16 MXU rounding can flip rows that
    # sit within rounding distance of a hyperplane -> small tolerance).
    code_ref = _reference_code(z, weight, beta, fun_dim)
    agree = float(jnp.mean((jnp.argmax(out_f, axis=-1) == code_ref).astype(jnp.float32)))
    assert agree > 0.95, agree

    if check_code:
        code = jax.block_until_ready(
            hyperplane_context(z, weight, beta, fun_dim, return_code=True))
        assert code.shape == (N, outp_dim) and code.dtype == jnp.int32
        assert bool(jnp.all((code >= 0) & (code < n_codes)))
        agree_c = float(jnp.mean((code == code_ref).astype(jnp.float32)))
        assert agree_c > 0.95, agree_c


if __name__ == "__main__":
    key = jax.random.PRNGKey(0)
    k1, k2 = jax.random.split(key)
    # Small shapes consistent with the module; oc=64 exercises the 2-row lane fold.
    _run_and_check(k1, N=16, inp_dim=32, outp_dim=8, fun_dim=3)
    # Larger batch: oc=128 (no fold), N=1000 picks a no-pad 5x200 grid; also
    # exercises the integer-code output variant.
    _run_and_check(k2, N=1000, inp_dim=64, outp_dim=16, fun_dim=3, check_code=True)
    print("KERNEL_OK")
</pallas_src>

<mosaic_0001>
module attributes {stable_mosaic.version = 11 : i64} {
  func.func @_onehot_kernel(%arg0: i32, %arg1: memref<8x64xbf16, #tpu.memory_space<vmem>>, %arg2: memref<64x48xbf16, #tpu.memory_space<vmem>>, %arg3: memref<1x48xf32, #tpu.memory_space<vmem>>, %arg4: memref<48x128xbf16, #tpu.memory_space<vmem>>, %arg5: memref<1x128xf32, #tpu.memory_space<vmem>>, %arg6: memref<8x128xbf16, #tpu.memory_space<vmem>>) attributes {dimension_semantics = [#tpu.dimension_semantics<parallel>], iteration_bounds = array<i64: 1>, scalar_prefetch = 0 : i64, scratch_operands = 0 : i64, tpu.core_type = #tpu.core_type<tc>, window_params = [{transform_indices = @transform_0, window_bounds = array<i64: 8, 64>}, {pipeline_mode = #tpu.pipeline_mode<synchronous>, transform_indices = @transform_1, window_bounds = array<i64: 64, 48>}, {pipeline_mode = #tpu.pipeline_mode<synchronous>, transform_indices = @transform_2, window_bounds = array<i64: 1, 48>}, {pipeline_mode = #tpu.pipeline_mode<synchronous>, transform_indices = @transform_3, window_bounds = array<i64: 48, 128>}, {pipeline_mode = #tpu.pipeline_mode<synchronous>, transform_indices = @transform_4, window_bounds = array<i64: 1, 128>}, {transform_indices = @transform_5, window_bounds = array<i64: 8, 128>}]} {
    %c0 = arith.constant 0 : index
    %c0_0 = arith.constant 0 : index
    %0 = vector.load %arg1[%c0, %c0_0] : memref<8x64xbf16, #tpu.memory_space<vmem>>, vector<8x64xbf16>
    %c0_1 = arith.constant 0 : index
    %c0_2 = arith.constant 0 : index
    %1 = vector.load %arg2[%c0_1, %c0_2] : memref<64x48xbf16, #tpu.memory_space<vmem>>, vector<64x48xbf16>
    %cst = arith.constant dense<0.000000e+00> : vector<8x48xf32>
    %2 = tpu.matmul %0, %1, %cst {dimension_numbers = #tpu.dot_dimension_numbers<[1], [0], [0], [1], [0, 0, 1, 1], [], []>} : vector<8x64xbf16>, vector<64x48xbf16>, vector<8x48xf32> -> vector<8x48xf32>
    %c0_3 = arith.constant 0 : index
    %c0_4 = arith.constant 0 : index
    %3 = vector.load %arg3[%c0_3, %c0_4] : memref<1x48xf32, #tpu.memory_space<vmem>>, vector<1x48xf32>
    %4 = vector.broadcast %3 : vector<1x48xf32> to vector<8x48xf32>
    %5 = arith.cmpf ogt, %2, %4 : vector<8x48xf32>
    %6 = arith.extui %5 : vector<8x48xi1> to vector<8x48xi32>
    %7 = arith.sitofp %6 : vector<8x48xi32> to vector<8x48xf32>
    %8 = arith.truncf %7 : vector<8x48xf32> to vector<8x48xbf16>
    %c0_5 = arith.constant 0 : index
    %c0_6 = arith.constant 0 : index
    %9 = vector.load %arg4[%c0_5, %c0_6] : memref<48x128xbf16, #tpu.memory_space<vmem>>, vector<48x128xbf16>
    %cst_7 = arith.constant dense<0.000000e+00> : vector<8x128xf32>
    %10 = tpu.matmul %8, %9, %cst_7 {dimension_numbers = #tpu.dot_dimension_numbers<[1], [0], [0], [1], [0, 0, 1, 1], [], []>} : vector<8x48xbf16>, vector<48x128xbf16>, vector<8x128xf32> -> vector<8x128xf32>
    %c0_8 = arith.constant 0 : index
    %c0_9 = arith.constant 0 : index
    %11 = vector.load %arg5[%c0_8, %c0_9] : memref<1x128xf32, #tpu.memory_space<vmem>>, vector<1x128xf32>
    %12 = vector.broadcast %11 : vector<1x128xf32> to vector<8x128xf32>
    %13 = arith.cmpf oeq, %10, %12 : vector<8x128xf32>
    %14 = arith.extui %13 : vector<8x128xi1> to vector<8x128xi32>
    %15 = arith.sitofp %14 : vector<8x128xi32> to vector<8x128xf32>
    %16 = arith.truncf %15 : vector<8x128xf32> to vector<8x128xbf16>
    %c0_10 = arith.constant 0 : index
    %c0_11 = arith.constant 0 : index
    %17 = vector.load %arg6[%c0_10, %c0_11] : memref<8x128xbf16, #tpu.memory_space<vmem>>, vector<8x128xbf16>
    tpu.vector_store %arg6[%c0_10, %c0_11], %16 {strides = array<i32>} : memref<8x128xbf16, #tpu.memory_space<vmem>>, vector<8x128xbf16>,
    return
  }
  func.func @transform_0(%arg0: i32) -> (i32, i32) {
    %c0_i32 = arith.constant 0 : i32
    %c0_i32_0 = arith.constant 0 : i32
    return %arg0, %c0_i32 : i32, i32
  }
  func.func @transform_1(%arg0: i32) -> (i32, i32) {
    %c0_i32 = arith.constant 0 : i32
    %c0_i32_0 = arith.constant 0 : i32
    %c0_i32_1 = arith.constant 0 : i32
    return %c0_i32, %c0_i32_0 : i32, i32
  }
  func.func @transform_2(%arg0: i32) -> (i32, i32) {
    %c0_i32 = arith.constant 0 : i32
    %c0_i32_0 = arith.constant 0 : i32
    %c0_i32_1 = arith.constant 0 : i32
    return %c0_i32, %c0_i32_0 : i32, i32
  }
  func.func @transform_3(%arg0: i32) -> (i32, i32) {
    %c0_i32 = arith.constant 0 : i32
    %c0_i32_0 = arith.constant 0 : i32
    %c0_i32_1 = arith.constant 0 : i32
    return %c0_i32, %c0_i32_0 : i32, i32
  }
  func.func @transform_4(%arg0: i32) -> (i32, i32) {
    %c0_i32 = arith.constant 0 : i32
    %c0_i32_0 = arith.constant 0 : i32
    %c0_i32_1 = arith.constant 0 : i32
    return %c0_i32, %c0_i32_0 : i32, i32
  }
  func.func @transform_5(%arg0: i32) -> (i32, i32) {
    %c0_i32 = arith.constant 0 : i32
    %c0_i32_0 = arith.constant 0 : i32
    return %arg0, %c0_i32 : i32, i32
  }
}

</mosaic_0001>

<llo_original>
// kernel: hyperplane_context.1
$region0: #{hyperplane_context.1}
  #allocation0 [shape = 'u32[]', space=smem, size = 0x4, offset = 0x4, fixed_abs, tag = 'smem constant byte address 0x4 - core index']
  #allocation1 [shape = 'u32[72,128]{1,0:T(1,128)}', space=vmem, size = 0x9000, scoped, tag = 'internal scratch']
  %s0 = inlined_call_operand.vmem [shape: bf16[8,64], index: 0, kind: input, shape index: {}]
  %s1 = inlined_call_operand.vmem [shape: bf16[64,48], index: 1, kind: input, shape index: {}]
  %s2 = inlined_call_operand.vmem [shape: f32[1,48], index: 2, kind: input, shape index: {}]
  %s3 = inlined_call_operand.vmem [shape: bf16[48,128], index: 3, kind: input, shape index: {}]
  %s4 = inlined_call_operand.vmem [shape: f32[1,128], index: 4, kind: input, shape index: {}]
  %s5 = inlined_call_operand.vmem [shape: bf16[8,128], index: 5, kind: output, shape index: {}]
  %s6 = sld [smem:[#allocation0]]
  $region30: #{hyperplane_context.1} parent=0
    _
  %s8 = ssub.s32 1, %s6
  %s9 = scalar_select 0, %s8, %s6
  // Predicated region
  $region2: #{hyperplane_context.1} parent=0 // pred_check
    _
  $region3: #{hyperplane_context.1} parent=0 // pred_check_branch
    %11 = sbr.rel (0) target = $region5
  $region4: #{hyperplane_context.1} parent=0 // pred_region
    _
  $region5: #{hyperplane_context.1} parent=0 // pred_fallthru
    _
  // Predicated region
  $region6: #{hyperplane_context.1} parent=0 // pred_check
    _
  $region7: #{hyperplane_context.1} parent=0 // pred_check_branch
    %13 = sbr.rel (0) target = $region9
  $region8: #{hyperplane_context.1} parent=0 // pred_region
    _
  $region9: #{hyperplane_context.1} parent=0 // pred_fallthru
    _
  // Predicated region
  $region10: #{hyperplane_context.1} parent=0 // pred_check
    _
  $region11: #{hyperplane_context.1} parent=0 // pred_check_branch
    %15 = sbr.rel (0) target = $region13
  $region12: #{hyperplane_context.1} parent=0 // pred_region
    _
  $region13: #{hyperplane_context.1} parent=0 // pred_fallthru
    _
  // Predicated region
  $region14: #{hyperplane_context.1} parent=0 // pred_check
    _
  $region15: #{hyperplane_context.1} parent=0 // pred_check_branch
    %17 = sbr.rel (0) target = $region17
  $region16: #{hyperplane_context.1} parent=0 // pred_region
    _
  $region17: #{hyperplane_context.1} parent=0 // pred_fallthru
    _
  // Predicated region
  $region18: #{hyperplane_context.1} parent=0 // pred_check
    _
  $region19: #{hyperplane_context.1} parent=0 // pred_check_branch
    %19 = sbr.rel (0) target = $region21
  $region20: #{hyperplane_context.1} parent=0 // pred_region
    _
  $region21: #{hyperplane_context.1} parent=0 // pred_fallthru
    _
  %v21 = vld [vmem:[%s0] sm:$0xf]
  %v22 = vld [vmem:[%s1] sm:$0xf]
  %v23 = vld [vmem:[%s1 + $0x4] sm:$0xf]
  %v24 = vld [vmem:[%s1 + $0x8] sm:$0xf]
  %v25 = vld [vmem:[%s1 + $0xc] sm:$0xf]
  %v26 = vld [vmem:[%s1 + $0x10] sm:$0xf]
  %v27 = vld [vmem:[%s1 + $0x14] sm:$0xf]
  %v28 = vld [vmem:[%s1 + $0x18] sm:$0xf]
  %v29 = vld [vmem:[%s1 + $0x1c] sm:$0xf]
  %v38 = vunpack.c.l.b16 %v22
  %v39 = vunpack.c.l.b16 %v23
  %v40 = vunpack.c.l.b16 %v24
  %v41 = vunpack.c.l.b16 %v25
  %v42 = vunpack.c.l.b16 %v26
  %v43 = vunpack.c.l.b16 %v27
  %v44 = vunpack.c.l.b16 %v28
  %v45 = vunpack.c.l.b16 %v29
  %v46 = vpack.c.b16 %v39, %v38
  %v47 = vpack.c.b16 %v41, %v40
  %v48 = vpack.c.b16 %v43, %v42
  %v49 = vpack.c.b16 %v45, %v44
  %vm54 = vcmask 523264
  %v56 = vsel %vm54, %v21, 0
  %58 = vmatpush.bf16.msra.mxu0 0
  %59 = vmatpush.bf16.msra.mxu0 0
  %60 = vmatpush.bf16.msra.mxu0 0
  %61 = vmatpush.bf16.msra.mxu0 0
  %62 = vmatpush.bf16.msra.mxu0 %v49
  %63 = vmatpush.bf16.msra.mxu0 %v48
  %64 = vmatpush.bf16.msra.mxu0 %v47
  %65 = vmatpush.bf16.msra.mxu0 %v46
  %66 = vmatmul.bf16.gmra.mxu0 %v56
  %v67 = vpop.f32.mrf.mxu0
  %v68 = vadd.f32 0.0, %v67
  %v69 = vpop.f32.mrf.mxu0
  %70 = vdwg.mxu0
  %v71 = vld [vmem:[%s2] sm:$0x1]
  %v73 = vperm.slane %v71, 0
  %vm75 = vcmp.gt.f32.partialorder %v68, %v73
  %v76 = vsel %vm75, 1, 0
  %v77 = vcvt.s32.f32 %v76
  %v78 = vpack.c.bf16 %v77, %v77
  %v79 = vld [vmem:[%s3] sm:$0xf]
  %v80 = vld [vmem:[%s3 + $0x4] sm:$0xf]
  %v81 = vld [vmem:[%s3 + $0x8] sm:$0xf]
  %v82 = vld [vmem:[%s3 + $0xc] sm:$0xf]
  %v83 = vld [vmem:[%s3 + $0x10] sm:$0xf]
  %v84 = vld [vmem:[%s3 + $0x14] sm:$0xf]
  %v91 = vunpack.c.l.b16 %v79
  %v92 = vunpack.c.l.b16 %v80
  %v93 = vunpack.c.l.b16 %v81
  %v94 = vunpack.c.l.b16 %v82
  %v95 = vunpack.c.l.b16 %v83
  %v96 = vunpack.c.l.b16 %v84
  %v97 = vpack.c.b16 %v92, %v91
  %v98 = vpack.c.b16 %v94, %v93
  %v99 = vpack.c.b16 %v96, %v95
  %vm103 = vcmask 392192
  %v105 = vsel %vm103, %v78, 0
  %107 = vmatpush.bf16.msra.mxu0 0
  %108 = vmatpush.bf16.msra.mxu0 0
  %109 = vmatpush.bf16.msra.mxu0 0
  %110 = vmatpush.bf16.msra.mxu0 0
  %111 = vmatpush.bf16.msra.mxu0 0
  %112 = vmatpush.bf16.msra.mxu0 %v99
  %113 = vmatpush.bf16.msra.mxu0 %v98
  %114 = vmatpush.bf16.msra.mxu0 %v97
  %115 = vmatmul.bf16.gmra.mxu0 %v105
  %v116 = vpop.f32.mrf.mxu0
  %v117 = vadd.f32 0.0, %v116
  %v118 = vpop.f32.mrf.mxu0
  %119 = vdwg.mxu0
  %v120 = vld [vmem:[%s4] sm:$0x1]
  %v122 = vperm.slane %v120, 0
  %vm124 = vcmp.eq.f32.partialorder %v117, %v122
  %v125 = vsel %vm124, 1, 0
  %v126 = vcvt.s32.f32 %v125
  %v127 = vpack.c.bf16 %v126, %v126
  %128 = vst [vmem:[%s5] sm:$0xf] %v127
  // Predicated region
  $region22: #{hyperplane_context.1} parent=0 // pred_check
    _
  $region23: #{hyperplane_context.1} parent=0 // pred_check_branch
    %130 = sbr.rel (0) target = $region25
  $region24: #{hyperplane_context.1} parent=0 // pred_region
    _
  $region25: #{hyperplane_context.1} parent=0 // pred_fallthru
    _
  // Predicated region
  $region26: #{hyperplane_context.1} parent=0 // pred_check
    _
  $region27: #{hyperplane_context.1} parent=0 // pred_check_branch
    %132 = sbr.rel (0) target = $region29
  $region28: #{hyperplane_context.1} parent=0 // pred_region
    _
  $region29: #{hyperplane_context.1} parent=0 // pred_fallthru
    _

</llo_original>
